<compile_context>
chip_gen: v7x
topology: tpu7x:2x2x1
jax: 0.10.0
libtpu: 0.0.40
codegen_flags: <defaults>
</compile_context>

<pallas_src>
import jax
import jax.numpy as jnp
from jax import lax
from jax.experimental import pallas as pl
from jax.experimental.pallas import tpu as pltpu


def _round_up(v, m):
    return (v + m - 1) // m * m


def cross_attention(x, context, wq, wk, wv, wo, bo, *, heads, dim_head,
                    mxu_dtype=jnp.bfloat16, tq_max=512, approx_recip=True):
    """Pallas CrossAttention forward.

    x:       (B, N, query_dim)
    context: (B, M, context_dim)
    wq: (query_dim, inner)   wk/wv: (context_dim, inner)
    wo: (inner, query_dim)   bo: (query_dim,)
    """
    B, N, Dq = x.shape
    _, M, Dc = context.shape
    inner = heads * dim_head
    assert wq.shape == (Dq, inner) and wk.shape == (Dc, inner)
    assert wv.shape == (Dc, inner) and wo.shape == (inner, Dq)
    assert bo.shape == (Dq,)
    scale = float(dim_head) ** (-0.5)
    out_dtype = x.dtype
    H, d = heads, dim_head

    # ---- host-side parameter / K / V prep ----------------------------------
    Dq_p = _round_up(Dq, 128)   # lane-dense output stores
    M_p = _round_up(M, 128)     # lane-dense softmax rows

    wq_c = (wq * scale).astype(mxu_dtype)                            # (Dq, inner), scale folded
    wo_c = jnp.pad(wo, ((0, 0), (0, Dq_p - Dq))).astype(mxu_dtype)   # (inner, Dq_p)
    bo_p = jnp.pad(bo, (0, Dq_p - Dq)).astype(jnp.float32).reshape(1, Dq_p)

    # K / V depend only on (batch, head): project once, full width (all heads
    # fused -> full MXU fill), then reshape head-major for the kernel.
    c_c = context.astype(mxu_dtype)
    kf = jnp.einsum('bmc,ce->bme', c_c, wk.astype(mxu_dtype),
                    preferred_element_type=jnp.float32)
    vf = jnp.einsum('bmc,ce->bme', c_c, wv.astype(mxu_dtype),
                    preferred_element_type=jnp.float32)
    kf = jnp.pad(kf, ((0, 0), (0, M_p - M), (0, 0)))
    vf = jnp.pad(vf, ((0, 0), (0, M_p - M), (0, 0)))
    k_hm = kf.reshape(B, M_p, H, d).transpose(0, 2, 1, 3).astype(mxu_dtype)  # (B,H,M_p,d)
    v_hm = vf.reshape(B, M_p, H, d).transpose(0, 2, 1, 3).astype(mxu_dtype)  # (B,H,M_p,d)

    # ---- query-sequence tiling ----------------------------------------------
    tq = tq_max if N >= tq_max else _round_up(N, 8)
    N_p = _round_up(N, tq)
    x_p = jnp.pad(x, ((0, 0), (0, N_p - N), (0, 0))) if N_p != N else x
    n_tiles = N_p // tq

    def kernel(x_ref, k_ref, v_ref, wq_ref, wo_ref, bo_ref, o_ref):
        # x_ref (1,tq,Dq); k_ref/v_ref (1,H,M_p,d); wq (Dq,inner);
        # wo (inner,Dq_p); bo (1,Dq_p); o (1,tq,Dq_p)
        xt = x_ref[0].astype(mxu_dtype)                              # (tq, Dq)
        # Full-width Q projection (all heads at once), f32 accumulation.
        q_all = jnp.dot(xt, wq_ref[...],
                        preferred_element_type=jnp.float32)          # (tq, inner)
        head_outs = []
        for h in range(H):                       # H is small -> unrolled
            q_h = q_all[:, h * d:(h + 1) * d].astype(mxu_dtype)      # (tq, d)
            k_h = k_ref[0, h]                                        # (M_p, d)
            v_h = v_ref[0, h]                                        # (M_p, d)
            sim = lax.dot_general(q_h, k_h, (((1,), (1,)), ((), ())),
                                  preferred_element_type=jnp.float32)  # (tq, M_p)
            if M_p != M:
                col = lax.broadcasted_iota(jnp.int32, sim.shape, 1)
                sim = jnp.where(col < M, sim, jnp.float32(-1e30))
            sim = sim - jnp.max(sim, axis=-1, keepdims=True)
            p = jnp.exp(sim)
            l = jnp.sum(p, axis=-1, keepdims=True)
            if approx_recip:
                attn = p * pl.reciprocal(l, approx=True)             # EUP, nearly free
            else:
                attn = p / l
            head_outs.append(
                jnp.dot(attn.astype(mxu_dtype), v_h,
                        preferred_element_type=jnp.float32))         # (tq, d)
        out_all = (jnp.concatenate(head_outs, axis=-1) if H > 1
                   else head_outs[0]).astype(mxu_dtype)              # (tq, inner)
        # Single full-width output projection + bias (lane-dense, Dq padded).
        y = jnp.dot(out_all, wo_ref[...],
                    preferred_element_type=jnp.float32)              # (tq, Dq_p)
        o_ref[0] = (y + bo_ref[...]).astype(o_ref.dtype)

    out = pl.pallas_call(
        kernel,
        out_shape=jax.ShapeDtypeStruct((B, N_p, Dq_p), out_dtype),
        grid_spec=pltpu.PrefetchScalarGridSpec(
            num_scalar_prefetch=0,
            grid=(B, n_tiles),
            in_specs=[
                pl.BlockSpec((1, tq, Dq), lambda b, i: (b, i, 0)),        # x tile
                pl.BlockSpec((1, H, M_p, d), lambda b, i: (b, 0, 0, 0)),  # K (per batch)
                pl.BlockSpec((1, H, M_p, d), lambda b, i: (b, 0, 0, 0)),  # V (per batch)
                pl.BlockSpec((Dq, inner), lambda b, i: (0, 0)),           # Wq (grid-invariant)
                pl.BlockSpec((inner, Dq_p), lambda b, i: (0, 0)),         # Wo (grid-invariant)
                pl.BlockSpec((1, Dq_p), lambda b, i: (0, 0)),             # bias
            ],
            out_specs=pl.BlockSpec((1, tq, Dq_p), lambda b, i: (b, i, 0)),
        ),
        compiler_params=pltpu.CompilerParams(
            dimension_semantics=("parallel", "parallel"),
            vmem_limit_bytes=48 * 1024 * 1024),
    )(x_p, k_hm, v_hm, wq_c, wo_c, bo_p)

    return out[:, :N, :Dq]


def cross_attention_ref(x, context, wq, wk, wv, wo, bo, *, heads, dim_head):
    """Pure-JAX f32 reference mirroring the PyTorch module."""
    B, N, _ = x.shape
    M = context.shape[1]
    scale = float(dim_head) ** (-0.5)
    q = jnp.einsum('bnd,de->bne', x, wq)
    k = jnp.einsum('bmd,de->bme', context, wk)
    v = jnp.einsum('bmd,de->bme', context, wv)
    q = q.reshape(B, N, heads, dim_head).transpose(0, 2, 1, 3)
    k = k.reshape(B, M, heads, dim_head).transpose(0, 2, 1, 3)
    v = v.reshape(B, M, heads, dim_head).transpose(0, 2, 1, 3)
    sim = jnp.einsum('bhid,bhjd->bhij', q, k) * scale
    attn = jax.nn.softmax(sim, axis=-1)
    out = jnp.einsum('bhij,bhjd->bhid', attn, v)
    out = out.transpose(0, 2, 1, 3).reshape(B, N, heads * dim_head)
    return jnp.einsum('bne,ed->bnd', out, wo) + bo


if __name__ == "__main__":
    # Small, module-consistent shapes.
    B, N, M = 2, 16, 8
    query_dim, context_dim = 32, 48
    heads, dim_head = 2, 16
    inner = heads * dim_head

    key = jax.random.PRNGKey(0)
    kx, kc, k1, k2, k3, k4, k5 = jax.random.split(key, 7)

    x = jax.random.normal(kx, (B, N, query_dim), dtype=jnp.float32)
    context = jax.random.normal(kc, (B, M, context_dim), dtype=jnp.float32)

    def init_w(k, fan_in, fan_out):
        bound = 1.0 / (fan_in ** 0.5)
        return jax.random.uniform(k, (fan_in, fan_out), jnp.float32, -bound, bound)

    wq = init_w(k1, query_dim, inner)
    wk = init_w(k2, context_dim, inner)
    wv = init_w(k3, context_dim, inner)
    wo = init_w(k4, inner, query_dim)
    bo = jax.random.uniform(k5, (query_dim,), jnp.float32,
                            -1.0 / (inner ** 0.5), 1.0 / (inner ** 0.5))

    ref = cross_attention_ref(x, context, wq, wk, wv, wo, bo,
                              heads=heads, dim_head=dim_head)

    # Performance-default path: bf16 MXU operands, approx EUP reciprocal.
    out_bf16 = cross_attention(x, context, wq, wk, wv, wo, bo,
                               heads=heads, dim_head=dim_head)
    out_bf16 = jax.block_until_ready(out_bf16)
    assert out_bf16.shape == (B, N, query_dim)
    assert jnp.allclose(out_bf16, ref, rtol=5e-2, atol=5e-2), "bf16 path mismatch"

    # Full-fidelity path: f32 MXU operands, exact softmax normalization.
    out_f32 = cross_attention(x, context, wq, wk, wv, wo, bo,
                              heads=heads, dim_head=dim_head,
                              mxu_dtype=jnp.float32, approx_recip=False)
    out_f32 = jax.block_until_ready(out_f32)
    assert jnp.allclose(out_f32, ref, rtol=1e-4, atol=1e-4), "f32 path mismatch"

    print("KERNEL_OK")
</pallas_src>

<mosaic_0001>
module attributes {stable_mosaic.version = 11 : i64} {
  func.func @kernel(%arg0: i32, %arg1: i32, %arg2: memref<1x16x32xf32, #tpu.memory_space<vmem>>, %arg3: memref<1x2x128x16xbf16, #tpu.memory_space<vmem>>, %arg4: memref<1x2x128x16xbf16, #tpu.memory_space<vmem>>, %arg5: memref<32x32xbf16, #tpu.memory_space<vmem>>, %arg6: memref<32x128xbf16, #tpu.memory_space<vmem>>, %arg7: memref<1x128xf32, #tpu.memory_space<vmem>>, %arg8: memref<1x16x128xf32, #tpu.memory_space<vmem>>) attributes {dimension_semantics = [#tpu.dimension_semantics<parallel>, #tpu.dimension_semantics<parallel>], iteration_bounds = array<i64: 2, 1>, scalar_prefetch = 0 : i64, scratch_operands = 0 : i64, tpu.core_type = #tpu.core_type<tc>, window_params = [{transform_indices = @transform_0, window_bounds = array<i64: 1, 16, 32>}, {transform_indices = @transform_1, window_bounds = array<i64: 1, 2, 128, 16>}, {transform_indices = @transform_2, window_bounds = array<i64: 1, 2, 128, 16>}, {pipeline_mode = #tpu.pipeline_mode<synchronous>, transform_indices = @transform_3, window_bounds = array<i64: 32, 32>}, {pipeline_mode = #tpu.pipeline_mode<synchronous>, transform_indices = @transform_4, window_bounds = array<i64: 32, 128>}, {pipeline_mode = #tpu.pipeline_mode<synchronous>, transform_indices = @transform_5, window_bounds = array<i64: 1, 128>}, {transform_indices = @transform_6, window_bounds = array<i64: 1, 16, 128>}]} {
    %c0 = arith.constant 0 : index
    %c0_0 = arith.constant 0 : index
    %c0_1 = arith.constant 0 : index
    %0 = vector.load %arg2[%c0, %c0_0, %c0_1] : memref<1x16x32xf32, #tpu.memory_space<vmem>>, vector<1x16x32xf32>
    %1 = vector.shape_cast %0 : vector<1x16x32xf32> to vector<16x32xf32>
    %2 = arith.truncf %1 : vector<16x32xf32> to vector<16x32xbf16>
    %c0_2 = arith.constant 0 : index
    %c0_3 = arith.constant 0 : index
    %3 = vector.load %arg5[%c0_2, %c0_3] : memref<32x32xbf16, #tpu.memory_space<vmem>>, vector<32x32xbf16>
    %cst = arith.constant dense<0.000000e+00> : vector<16x32xf32>
    %4 = tpu.matmul %2, %3, %cst {dimension_numbers = #tpu.dot_dimension_numbers<[1], [0], [0], [1], [0, 0, 1, 1], [], []>} : vector<16x32xbf16>, vector<32x32xbf16>, vector<16x32xf32> -> vector<16x32xf32>
    %5 = vector.extract_strided_slice %4 {offsets = [0, 0], sizes = [16, 16], strides = [1, 1]} : vector<16x32xf32> to vector<16x16xf32>
    %6 = arith.truncf %5 : vector<16x16xf32> to vector<16x16xbf16>
    %c0_4 = arith.constant 0 : index
    %c0_5 = arith.constant 0 : index
    %c0_6 = arith.constant 0 : index
    %c0_7 = arith.constant 0 : index
    %7 = vector.load %arg3[%c0_4, %c0_5, %c0_6, %c0_7] : memref<1x2x128x16xbf16, #tpu.memory_space<vmem>>, vector<1x1x128x16xbf16>
    %8 = vector.shape_cast %7 : vector<1x1x128x16xbf16> to vector<128x16xbf16>
    %c0_8 = arith.constant 0 : index
    %c0_9 = arith.constant 0 : index
    %c0_10 = arith.constant 0 : index
    %c0_11 = arith.constant 0 : index
    %9 = vector.load %arg4[%c0_8, %c0_9, %c0_10, %c0_11] : memref<1x2x128x16xbf16, #tpu.memory_space<vmem>>, vector<1x1x128x16xbf16>
    %10 = vector.shape_cast %9 : vector<1x1x128x16xbf16> to vector<128x16xbf16>
    %cst_12 = arith.constant dense<0.000000e+00> : vector<16x128xf32>
    %11 = tpu.matmul %6, %8, %cst_12 {dimension_numbers = #tpu.dot_dimension_numbers<[1], [1], [0], [0], [0, 0, 1, 0], [], []>} : vector<16x16xbf16>, vector<128x16xbf16>, vector<16x128xf32> -> vector<16x128xf32>
    %12 = tpu.iota {dimensions = array<i32: 1>} : vector<16x128xi32>
    %c8_i32 = arith.constant 8 : i32
    %13 = vector.broadcast %c8_i32 : i32 to vector<16x128xi32>
    %14 = arith.cmpi slt, %12, %13 : vector<16x128xi32>
    %cst_13 = arith.constant -1.000000e+30 : f32
    %15 = vector.broadcast %cst_13 : f32 to vector<16x128xf32>
    %16 = arith.select %14, %11, %15 : vector<16x128xi1>, vector<16x128xf32>
    %cst_14 = arith.constant dense<0xFF800000> : vector<16xf32>
    %17 = vector.multi_reduction <maximumf>, %16, %cst_14 [1] : vector<16x128xf32> to vector<16xf32>
    %18 = vector.shape_cast %17 : vector<16xf32> to vector<16x1xf32>
    %19 = vector.broadcast %18 : vector<16x1xf32> to vector<16x128xf32>
    %20 = arith.subf %16, %19 : vector<16x128xf32>
    %21 = math.exp %20 : vector<16x128xf32>
    %cst_15 = arith.constant dense<0.000000e+00> : vector<16xf32>
    %22 = vector.multi_reduction <add>, %21, %cst_15 [1] : vector<16x128xf32> to vector<16xf32>
    %23 = vector.shape_cast %22 : vector<16xf32> to vector<16x1xf32>
    %24 = tpu.reciprocal %23 {approx = true} : vector<16x1xf32> -> vector<16x1xf32>
    %25 = vector.broadcast %24 : vector<16x1xf32> to vector<16x128xf32>
    %26 = arith.mulf %21, %25 : vector<16x128xf32>
    %27 = arith.truncf %26 : vector<16x128xf32> to vector<16x128xbf16>
    %cst_16 = arith.constant dense<0.000000e+00> : vector<16x16xf32>
    %28 = tpu.matmul %27, %10, %cst_16 {dimension_numbers = #tpu.dot_dimension_numbers<[1], [0], [0], [1], [0, 0, 1, 1], [], []>} : vector<16x128xbf16>, vector<128x16xbf16>, vector<16x16xf32> -> vector<16x16xf32>
    %29 = vector.extract_strided_slice %4 {offsets = [0, 16], sizes = [16, 16], strides = [1, 1]} : vector<16x32xf32> to vector<16x16xf32>
    %30 = arith.truncf %29 : vector<16x16xf32> to vector<16x16xbf16>
    %c0_17 = arith.constant 0 : index
    %c1 = arith.constant 1 : index
    %c0_18 = arith.constant 0 : index
    %c0_19 = arith.constant 0 : index
    %31 = vector.load %arg3[%c0_17, %c1, %c0_18, %c0_19] : memref<1x2x128x16xbf16, #tpu.memory_space<vmem>>, vector<1x1x128x16xbf16>
    %32 = vector.shape_cast %31 : vector<1x1x128x16xbf16> to vector<128x16xbf16>
    %c0_20 = arith.constant 0 : index
    %c1_21 = arith.constant 1 : index
    %c0_22 = arith.constant 0 : index
    %c0_23 = arith.constant 0 : index
    %33 = vector.load %arg4[%c0_20, %c1_21, %c0_22, %c0_23] : memref<1x2x128x16xbf16, #tpu.memory_space<vmem>>, vector<1x1x128x16xbf16>
    %34 = vector.shape_cast %33 : vector<1x1x128x16xbf16> to vector<128x16xbf16>
    %cst_24 = arith.constant dense<0.000000e+00> : vector<16x128xf32>
    %35 = tpu.matmul %30, %32, %cst_24 {dimension_numbers = #tpu.dot_dimension_numbers<[1], [1], [0], [0], [0, 0, 1, 0], [], []>} : vector<16x16xbf16>, vector<128x16xbf16>, vector<16x128xf32> -> vector<16x128xf32>
    %36 = tpu.iota {dimensions = array<i32: 1>} : vector<16x128xi32>
    %c8_i32_25 = arith.constant 8 : i32
    %37 = vector.broadcast %c8_i32_25 : i32 to vector<16x128xi32>
    %38 = arith.cmpi slt, %36, %37 : vector<16x128xi32>
    %cst_26 = arith.constant -1.000000e+30 : f32
    %39 = vector.broadcast %cst_26 : f32 to vector<16x128xf32>
    %40 = arith.select %38, %35, %39 : vector<16x128xi1>, vector<16x128xf32>
    %cst_27 = arith.constant dense<0xFF800000> : vector<16xf32>
    %41 = vector.multi_reduction <maximumf>, %40, %cst_27 [1] : vector<16x128xf32> to vector<16xf32>
    %42 = vector.shape_cast %41 : vector<16xf32> to vector<16x1xf32>
    %43 = vector.broadcast %42 : vector<16x1xf32> to vector<16x128xf32>
    %44 = arith.subf %40, %43 : vector<16x128xf32>
    %45 = math.exp %44 : vector<16x128xf32>
    %cst_28 = arith.constant dense<0.000000e+00> : vector<16xf32>
    %46 = vector.multi_reduction <add>, %45, %cst_28 [1] : vector<16x128xf32> to vector<16xf32>
    %47 = vector.shape_cast %46 : vector<16xf32> to vector<16x1xf32>
    %48 = tpu.reciprocal %47 {approx = true} : vector<16x1xf32> -> vector<16x1xf32>
    %49 = vector.broadcast %48 : vector<16x1xf32> to vector<16x128xf32>
    %50 = arith.mulf %45, %49 : vector<16x128xf32>
    %51 = arith.truncf %50 : vector<16x128xf32> to vector<16x128xbf16>
    %cst_29 = arith.constant dense<0.000000e+00> : vector<16x16xf32>
    %52 = tpu.matmul %51, %34, %cst_29 {dimension_numbers = #tpu.dot_dimension_numbers<[1], [0], [0], [1], [0, 0, 1, 1], [], []>} : vector<16x128xbf16>, vector<128x16xbf16>, vector<16x16xf32> -> vector<16x16xf32>
    %53 = tpu.concatenate %28, %52 in 1 : vector<16x16xf32>, vector<16x16xf32> -> vector<16x32xf32>
    %54 = arith.truncf %53 : vector<16x32xf32> to vector<16x32xbf16>
    %c0_30 = arith.constant 0 : index
    %c0_31 = arith.constant 0 : index
    %55 = vector.load %arg6[%c0_30, %c0_31] : memref<32x128xbf16, #tpu.memory_space<vmem>>, vector<32x128xbf16>
    %cst_32 = arith.constant dense<0.000000e+00> : vector<16x128xf32>
    %56 = tpu.matmul %54, %55, %cst_32 {dimension_numbers = #tpu.dot_dimension_numbers<[1], [0], [0], [1], [0, 0, 1, 1], [], []>} : vector<16x32xbf16>, vector<32x128xbf16>, vector<16x128xf32> -> vector<16x128xf32>
    %c0_33 = arith.constant 0 : index
    %c0_34 = arith.constant 0 : index
    %57 = vector.load %arg7[%c0_33, %c0_34] : memref<1x128xf32, #tpu.memory_space<vmem>>, vector<1x128xf32>
    %58 = vector.broadcast %57 : vector<1x128xf32> to vector<16x128xf32>
    %59 = arith.addf %56, %58 : vector<16x128xf32>
    %c0_35 = arith.constant 0 : index
    %c0_36 = arith.constant 0 : index
    %c0_37 = arith.constant 0 : index
    %60 = vector.load %arg8[%c0_35, %c0_36, %c0_37] : memref<1x16x128xf32, #tpu.memory_space<vmem>>, vector<1x16x128xf32>
    %61 = vector.shape_cast %60 : vector<1x16x128xf32> to vector<16x128xf32>
    %62 = vector.shape_cast %59 : vector<16x128xf32> to vector<1x16x128xf32>
    tpu.vector_store %arg8[%c0_35, %c0_36, %c0_37], %62 {strides = array<i32>} : memref<1x16x128xf32, #tpu.memory_space<vmem>>, vector<1x16x128xf32>,
    return
  }
  func.func @transform_0(%arg0: i32, %arg1: i32) -> (i32, i32, i32) {
    %c0_i32 = arith.constant 0 : i32
    %c0_i32_0 = arith.constant 0 : i32
    return %arg0, %arg1, %c0_i32 : i32, i32, i32
  }
  func.func @transform_1(%arg0: i32, %arg1: i32) -> (i32, i32, i32, i32) {
    %c0_i32 = arith.constant 0 : i32
    %c0_i32_0 = arith.constant 0 : i32
    %c0_i32_1 = arith.constant 0 : i32
    %c0_i32_2 = arith.constant 0 : i32
    return %arg0, %c0_i32, %c0_i32_0, %c0_i32_1 : i32, i32, i32, i32
  }
  func.func @transform_2(%arg0: i32, %arg1: i32) -> (i32, i32, i32, i32) {
    %c0_i32 = arith.constant 0 : i32
    %c0_i32_0 = arith.constant 0 : i32
    %c0_i32_1 = arith.constant 0 : i32
    %c0_i32_2 = arith.constant 0 : i32
    return %arg0, %c0_i32, %c0_i32_0, %c0_i32_1 : i32, i32, i32, i32
  }
  func.func @transform_3(%arg0: i32, %arg1: i32) -> (i32, i32) {
    %c0_i32 = arith.constant 0 : i32
    %c0_i32_0 = arith.constant 0 : i32
    %c0_i32_1 = arith.constant 0 : i32
    return %c0_i32, %c0_i32_0 : i32, i32
  }
  func.func @transform_4(%arg0: i32, %arg1: i32) -> (i32, i32) {
    %c0_i32 = arith.constant 0 : i32
    %c0_i32_0 = arith.constant 0 : i32
    %c0_i32_1 = arith.constant 0 : i32
    return %c0_i32, %c0_i32_0 : i32, i32
  }
  func.func @transform_5(%arg0: i32, %arg1: i32) -> (i32, i32) {
    %c0_i32 = arith.constant 0 : i32
    %c0_i32_0 = arith.constant 0 : i32
    %c0_i32_1 = arith.constant 0 : i32
    return %c0_i32, %c0_i32_0 : i32, i32
  }
  func.func @transform_6(%arg0: i32, %arg1: i32) -> (i32, i32, i32) {
    %c0_i32 = arith.constant 0 : i32
    %c0_i32_0 = arith.constant 0 : i32
    return %arg0, %arg1, %c0_i32 : i32, i32, i32
  }
}

</mosaic_0001>

<llo_original>
// kernel: tpu_custom_call.1
$region0: #{tpu_custom_call.1}
  #allocation0 [shape = 'u32[]', space=smem, size = 0x4, offset = 0x4, fixed_abs, tag = 'smem constant byte address 0x4 - core index']
  #allocation1 [shape = 'u32[144,128]{1,0:T(1,128)}', space=vmem, size = 0x12000, scoped, tag = 'internal scratch']
  %s0 = inlined_call_operand.vmem [shape: f32[2,16,32], index: 0, kind: input, shape index: {}]
  %s1 = inlined_call_operand.vmem [shape: bf16[2,2,128,16], index: 1, kind: input, shape index: {}]
  %s2 = inlined_call_operand.vmem [shape: bf16[2,2,128,16], index: 2, kind: input, shape index: {}]
  %s3 = inlined_call_operand.vmem [shape: bf16[32,32], index: 3, kind: input, shape index: {}]
  %s4 = inlined_call_operand.vmem [shape: bf16[32,128], index: 4, kind: input, shape index: {}]
  %s5 = inlined_call_operand.vmem [shape: f32[1,128], index: 5, kind: input, shape index: {}]
  %s6 = inlined_call_operand.hbm [shape: f32[2,16,128], index: 6, kind: output, shape index: {}]
  %s7 = sld [smem:[#allocation0]]
  $region57: #{tpu_custom_call.1} parent=0
    _
  %s9 = ssub.s32 1, %s7
  %s10 = scalar_select 0, %s9, %s7
  $region1: #{tpu_custom_call.1} parent=0
    #allocation2 [shape = 'u8[16384]{0}', space=vmem, size = 0x4000, scoped, tag = 'output window, operand 0']
    #allocation3 [shape = 's32[2]{0}', space=sflag, size = 0x8, scoped, tag = 'scoped memory for tpu_custom_call.1']
    %11 = vsyncpa [#allocation3], 0
    %s12 = scalar_lea.sflag [#allocation3], 1
    %13 = vsyncpa %s12, 0
    loop: start=0, step=1, limit=4
    $region2: #{tpu_custom_call.1} parent=1 // loop_pre_header
      _
    $region3: #{tpu_custom_call.1} parent=1 // loop_header
      %s15 = sphi 0, %s19
      %p16 = scmp.ge.s32.totalorder %s15, 4
      %s22 = sphi 0, %s34
      %s23 = sphi 0, %s30
      %s24 = sphi 0, %s22
      %s25 = sphi 0, %s23
      %s26 = sphi 0, %s24
      %s27 = sphi 0, %s25
      %s39 = sphi 0, %s41
      %s42 = sphi 0, %s39
      %s43 = sphi 0, %s42
      %s59 = sphi 0, %s43
      %s65 = sphi 0, %s67
      %s68 = sphi 0, %s65
      %s69 = sphi 0, %s68
      %s85 = sphi 0, %s69
      %s91 = sphi 0, %s93
      %s94 = sphi 0, %s91
      %s95 = sphi 0, %s94
      %s111 = sphi 0, %s95
      %s115 = sphi 0, %s115
      %s117 = sphi 0, %s115
      %s118 = sphi 0, %s117
      %s132 = sphi 0, %s118
      %s136 = sphi 0, %s136
      %s138 = sphi 0, %s136
      %s139 = sphi 0, %s138
      %s153 = sphi 0, %s139
      %s157 = sphi 0, %s157
      %s159 = sphi 0, %s157
      %s160 = sphi 0, %s159
      %s174 = sphi 0, %s160
      %s182 = sphi 0, %s184
      %s185 = sphi 0, %s182
      %s186 = sphi 0, %s185
      %s202 = sphi 0, %s186
    $region4: #{tpu_custom_call.1} parent=1 // loop_header_branch
      %18 = sbr.rel (%p16) target = $region8
    $region5: #{tpu_custom_call.1} parent=1 // loop_body
      %s20 = ssub.s32 %s15, 1
      %s21 = ssub.s32 %s15, 2
      %s28 = sadd.s32 1, %s23
      %p29 = scmp.ge.s32.totalorder %s28, 1
      %s30 = scalar_select %p29, 0, %s28
      %s31 = sadd.s32 1, %s22
      %s32 = scalar_select %p29, %s31, %s22
      %p33 = scmp.ge.s32.totalorder %s32, 2
      %s34 = scalar_select %p33, 0, %s32
      %s35 = ssub.s32 %s22, %s34
      %s36 = ssub.s32 %s23, %s30
      %s37 = sor.u32 %s35, %s36
      %p38 = scmp.eq.s32.totalorder %s37, 0
      %s40 = sadd.s32 %s39, 1
      %s41 = scalar_select %p38, %s39, %s40
      %p44 = pneg %p38
      %p45 = scmp.eq.s32.totalorder %s15, 1
      %p46 = por %p44, %p45
      %p47 = scmp.ne.s32.totalorder %s39, %s42
      %p48 = scmp.eq.s32.totalorder %s15, 0
      %p49 = por %p47, %p48
      %p50 = scmp.ne.s32.totalorder %s39, %s42
      %p51 = scmp.eq.s32.totalorder %s20, 1
      %p52 = por %p50, %p51
      %p53 = scmp.ne.s32.totalorder %s42, %s43
      %p54 = scmp.eq.s32.totalorder %s20, 0
      %p55 = por %p53, %p54
      %p56 = scmp.ne.s32.totalorder %s42, %s43
      %p57 = scmp.eq.s32.totalorder %s21, 1
      %p58 = por %p56, %p57
      %p60 = scmp.ne.s32.totalorder %s43, %s59
      %p61 = scmp.eq.s32.totalorder %s21, 0
      %p62 = por %p60, %p61
      %s63 = ssub.s32 %s22, %s34
      %p64 = scmp.eq.s32.totalorder %s63, 0
      %s66 = sadd.s32 %s65, 1
      %s67 = scalar_select %p64, %s65, %s66
      %p70 = pneg %p64
      %p71 = scmp.eq.s32.totalorder %s15, 1
      %p72 = por %p70, %p71
      %p73 = scmp.ne.s32.totalorder %s65, %s68
      %p74 = scmp.eq.s32.totalorder %s15, 0
      %p75 = por %p73, %p74
      %p76 = scmp.ne.s32.totalorder %s65, %s68
      %p77 = scmp.eq.s32.totalorder %s20, 1
      %p78 = por %p76, %p77
      %p79 = scmp.ne.s32.totalorder %s68, %s69
      %p80 = scmp.eq.s32.totalorder %s20, 0
      %p81 = por %p79, %p80
      %p82 = scmp.ne.s32.totalorder %s68, %s69
      %p83 = scmp.eq.s32.totalorder %s21, 1
      %p84 = por %p82, %p83
      %p86 = scmp.ne.s32.totalorder %s69, %s85
      %p87 = scmp.eq.s32.totalorder %s21, 0
      %p88 = por %p86, %p87
      %s89 = ssub.s32 %s22, %s34
      %p90 = scmp.eq.s32.totalorder %s89, 0
      %s92 = sadd.s32 %s91, 1
      %s93 = scalar_select %p90, %s91, %s92
      %p96 = pneg %p90
      %p97 = scmp.eq.s32.totalorder %s15, 1
      %p98 = por %p96, %p97
      %p99 = scmp.ne.s32.totalorder %s91, %s94
      %p100 = scmp.eq.s32.totalorder %s15, 0
      %p101 = por %p99, %p100
      %p102 = scmp.ne.s32.totalorder %s91, %s94
      %p103 = scmp.eq.s32.totalorder %s20, 1
      %p104 = por %p102, %p103
      %p105 = scmp.ne.s32.totalorder %s94, %s95
      %p106 = scmp.eq.s32.totalorder %s20, 0
      %p107 = por %p105, %p106
      %p108 = scmp.ne.s32.totalorder %s94, %s95
      %p109 = scmp.eq.s32.totalorder %s21, 1
      %p110 = por %p108, %p109
      %p112 = scmp.ne.s32.totalorder %s95, %s111
      %p113 = scmp.eq.s32.totalorder %s21, 0
      %p114 = por %p112, %p113
      %s116 = sadd.s32 %s115, 1
      %p119 = scmp.eq.s32.totalorder %s15, 1
      %p120 = scmp.ne.s32.totalorder %s115, %s117
      %p121 = scmp.eq.s32.totalorder %s15, 0
      %p122 = por %p120, %p121
      %p123 = scmp.ne.s32.totalorder %s115, %s117
      %p124 = scmp.eq.s32.totalorder %s20, 1
      %p125 = por %p123, %p124
      %p126 = scmp.ne.s32.totalorder %s117, %s118
      %p127 = scmp.eq.s32.totalorder %s20, 0
      %p128 = por %p126, %p127
      %p129 = scmp.ne.s32.totalorder %s117, %s118
      %p130 = scmp.eq.s32.totalorder %s21, 1
      %p131 = por %p129, %p130
      %p133 = scmp.ne.s32.totalorder %s118, %s132
      %p134 = scmp.eq.s32.totalorder %s21, 0
      %p135 = por %p133, %p134
      %s137 = sadd.s32 %s136, 1
      %p140 = scmp.eq.s32.totalorder %s15, 1
      %p141 = scmp.ne.s32.totalorder %s136, %s138
      %p142 = scmp.eq.s32.totalorder %s15, 0
      %p143 = por %p141, %p142
      %p144 = scmp.ne.s32.totalorder %s136, %s138
      %p145 = scmp.eq.s32.totalorder %s20, 1
      %p146 = por %p144, %p145
      %p147 = scmp.ne.s32.totalorder %s138, %s139
      %p148 = scmp.eq.s32.totalorder %s20, 0
      %p149 = por %p147, %p148
      %p150 = scmp.ne.s32.totalorder %s138, %s139
      %p151 = scmp.eq.s32.totalorder %s21, 1
      %p152 = por %p150, %p151
      %p154 = scmp.ne.s32.totalorder %s139, %s153
      %p155 = scmp.eq.s32.totalorder %s21, 0
      %p156 = por %p154, %p155
      %s158 = sadd.s32 %s157, 1
      %p161 = scmp.eq.s32.totalorder %s15, 1
      %p162 = scmp.ne.s32.totalorder %s157, %s159
      %p163 = scmp.eq.s32.totalorder %s15, 0
      %p164 = por %p162, %p163
      %p165 = scmp.ne.s32.totalorder %s157, %s159
      %p166 = scmp.eq.s32.totalorder %s20, 1
      %p167 = por %p165, %p166
      %p168 = scmp.ne.s32.totalorder %s159, %s160
      %p169 = scmp.eq.s32.totalorder %s20, 0
      %p170 = por %p168, %p169
      %p171 = scmp.ne.s32.totalorder %s159, %s160
      %p172 = scmp.eq.s32.totalorder %s21, 1
      %p173 = por %p171, %p172
      %p175 = scmp.ne.s32.totalorder %s160, %s174
      %p176 = scmp.eq.s32.totalorder %s21, 0
      %p177 = por %p175, %p176
      %s178 = ssub.s32 %s22, %s34
      %s179 = ssub.s32 %s23, %s30
      %s180 = sor.u32 %s178, %s179
      %p181 = scmp.eq.s32.totalorder %s180, 0
      %s183 = sadd.s32 %s182, 1
      %s184 = scalar_select %p181, %s182, %s183
      %p187 = pneg %p181
      %p188 = scmp.eq.s32.totalorder %s15, 1
      %p189 = por %p187, %p188
      %p190 = scmp.ne.s32.totalorder %s182, %s185
      %p191 = scmp.eq.s32.totalorder %s15, 0
      %p192 = por %p190, %p191
      %p193 = scmp.ne.s32.totalorder %s182, %s185
      %p194 = scmp.eq.s32.totalorder %s20, 1
      %p195 = por %p193, %p194
      %p196 = scmp.ne.s32.totalorder %s185, %s186
      %p197 = scmp.eq.s32.totalorder %s20, 0
      %p198 = por %p196, %p197
      %p199 = scmp.ne.s32.totalorder %s185, %s186
      %p200 = scmp.eq.s32.totalorder %s21, 1
      %p201 = por %p199, %p200
      %p203 = scmp.ne.s32.totalorder %s186, %s202
      %p204 = scmp.eq.s32.totalorder %s21, 0
      %p205 = por %p203, %p204
      %p206 = scmp.le.s32.totalorder 1, %s15
      %p207 = scmp.lt.s32.totalorder %s15, 3
      %p208 = pnand %p206, %p207
      %p209 = pneg %p208
      // Predicated region
      $region9: #{tpu_custom_call.1} parent=5 // pred_check
        _
      $region10: #{tpu_custom_call.1} parent=5 // pred_check_branch
        %211 = sbr.rel (%p208) target = $region12
      $region11: #{tpu_custom_call.1} parent=5 // pred_region
        %s212 = ssub.s32 %s15, 1
        // Predicated region
        $region13: #{tpu_custom_call.1} parent=11 // pred_check
          %p213 = pneg %p128
        $region14: #{tpu_custom_call.1} parent=11 // pred_check_branch
          %215 = sbr.rel (%p213) target = $region16
        $region15: #{tpu_custom_call.1} parent=11 // pred_region
          _
        $region16: #{tpu_custom_call.1} parent=11 // pred_fallthru
          _
        // Predicated region
        $region17: #{tpu_custom_call.1} parent=11 // pred_check
          %p216 = pneg %p149
        $region18: #{tpu_custom_call.1} parent=11 // pred_check_branch
          %218 = sbr.rel (%p216) target = $region20
        $region19: #{tpu_custom_call.1} parent=11 // pred_region
          _
        $region20: #{tpu_custom_call.1} parent=11 // pred_fallthru
          _
        // Predicated region
        $region21: #{tpu_custom_call.1} parent=11 // pred_check
          %p219 = pneg %p170
        $region22: #{tpu_custom_call.1} parent=11 // pred_check_branch
          %221 = sbr.rel (%p219) target = $region24
        $region23: #{tpu_custom_call.1} parent=11 // pred_region
          _
        $region24: #{tpu_custom_call.1} parent=11 // pred_fallthru
          _
      $region12: #{tpu_custom_call.1} parent=5 // pred_fallthru
        _
      %p222 = scmp.lt.s32.totalorder %s15, 2
      // Predicated region
      $region25: #{tpu_custom_call.1} parent=5 // pred_check
        %p223 = pneg %p222
      $region26: #{tpu_custom_call.1} parent=5 // pred_check_branch
        %225 = sbr.rel (%p223) target = $region28
      $region27: #{tpu_custom_call.1} parent=5 // pred_region
        // Predicated region
        $region29: #{tpu_custom_call.1} parent=27 // pred_check
          %p226 = pneg %p49
        $region30: #{tpu_custom_call.1} parent=27 // pred_check_branch
          %228 = sbr.rel (%p226) target = $region32
        $region31: #{tpu_custom_call.1} parent=27 // pred_region
          %s229 = smul.u32 2, %s23
          %p230 = scmp.lt.s32.totalorder %s22, 1
          %s231 = scalar_select %p230, %s22, 1
          %p232 = scmp.lt.s32.totalorder %s229, 1
          %s233 = scalar_select %p232, %s229, 1
          %s234 = smul.addr %s231, 2
          %s235 = sadd.s32 %s233, %s234
          %s236 = smul.addr %s235, 8
          %s237 = scalar_lea.vmem %s0, %s236
          %s238 = smul.u32 2, %s23
        $region32: #{tpu_custom_call.1} parent=27 // pred_fallthru
          _
        // Predicated region
        $region33: #{tpu_custom_call.1} parent=27 // pred_check
          %p239 = pneg %p75
        $region34: #{tpu_custom_call.1} parent=27 // pred_check_branch
          %241 = sbr.rel (%p239) target = $region36
        $region35: #{tpu_custom_call.1} parent=27 // pred_region
          %p242 = scmp.lt.s32.totalorder %s22, 1
          %s243 = scalar_select %p242, %s22, 1
          %s244 = smul.addr %s243, 32
          %s245 = smul.addr %s244, 4
          %s246 = scalar_lea.vmem %s1, %s245
        $region36: #{tpu_custom_call.1} parent=27 // pred_fallthru
          _
        // Predicated region
        $region37: #{tpu_custom_call.1} parent=27 // pred_check
          %p247 = pneg %p101
        $region38: #{tpu_custom_call.1} parent=27 // pred_check_branch
          %249 = sbr.rel (%p247) target = $region40
        $region39: #{tpu_custom_call.1} parent=27 // pred_region
          %p250 = scmp.lt.s32.totalorder %s22, 1
          %s251 = scalar_select %p250, %s22, 1
          %s252 = smul.addr %s251, 32
          %s253 = smul.addr %s252, 4
          %s254 = scalar_lea.vmem %s2, %s253
        $region40: #{tpu_custom_call.1} parent=27 // pred_fallthru
          _
      $region28: #{tpu_custom_call.1} parent=5 // pred_fallthru
        _
      %p255 = scmp.le.s32.totalorder 1, %s15
      %p256 = scmp.lt.s32.totalorder %s15, 3
      %p257 = pnand %p255, %p256
      %p258 = pneg %p257
      // Predicated region
      $region41: #{tpu_custom_call.1} parent=5 // pred_check
        _
      $region42: #{tpu_custom_call.1} parent=5 // pred_check_branch
        %260 = sbr.rel (%p257) target = $region44
      $region43: #{tpu_custom_call.1} parent=5 // pred_region
        %s261 = ssub.s32 %s15, 1
        %s262 = smul.u32 2, %s25
        %p263 = scmp.lt.s32.totalorder %s24, 1
        %s264 = scalar_select %p263, %s24, 1
        %p265 = scmp.lt.s32.totalorder %s262, 1
        %s266 = scalar_select %p265, %s262, 1
        %s267 = smul.addr %s264, 2
        %s268 = sadd.s32 %s266, %s267
        %s269 = smul.addr %s268, 8
        %s270 = scalar_lea.vmem %s0, %s269
        %p271 = pneg %p55
        %p272 = pneg %p52
        %p273 = scmp.lt.s32.totalorder %s24, 1
        %s274 = scalar_select %p273, %s24, 1
        %s275 = smul.addr %s274, 32
        %s276 = smul.addr %s275, 4
        %s277 = scalar_lea.vmem %s1, %s276
        %p278 = pneg %p81
        %p279 = pneg %p78
        %p280 = scmp.lt.s32.totalorder %s24, 1
        %s281 = scalar_select %p280, %s24, 1
        %s282 = smul.addr %s281, 32
        %s283 = smul.addr %s282, 4
        %s284 = scalar_lea.vmem %s2, %s283
        %p285 = pneg %p107
        %p286 = pneg %p104
        %p287 = pneg %p128
        %p288 = pneg %p125
        %p289 = pneg %p149
        %p290 = pneg %p146
        %p291 = pneg %p170
        %p292 = pneg %p167
        %p293 = pneg %p198
        %p294 = pneg %p195
        %s295 = sand.u32 %s185, 1
        %s296 = scalar_lea.sflag [#allocation3], %s295
        %s297 = sand.u32 %s185, 1
        %s298 = smul.addr %s297, 16
        %s299 = scalar_lea.vmem [#allocation2], %s298
        %s300 = smul.u32 2, %s25
        %p301 = scmp.lt.s32.totalorder %s24, 1
        %s302 = scalar_select %p301, %s24, 1
        %p303 = scmp.lt.s32.totalorder %s300, 1
        %s304 = scalar_select %p303, %s300, 1
        %s305 = smul.addr %s302, 2
        %s306 = sadd.s32 %s304, %s305
        %s307 = smul.addr %s306, 8
        %s308 = scalar_lea.vmem %s0, %s307
        %s309 = smul.u32 2, %s25
        %p310 = scmp.lt.s32.totalorder %s24, 1
        %s311 = scalar_select %p310, %s24, 1
        %s312 = smul.addr %s311, 32
        %s313 = smul.addr %s312, 4
        %s314 = scalar_lea.vmem %s1, %s313
        %p315 = scmp.lt.s32.totalorder %s24, 1
        %s316 = scalar_select %p315, %s24, 1
        %s317 = smul.addr %s316, 32
        %s318 = smul.addr %s317, 4
        %s319 = scalar_lea.vmem %s2, %s318
        %s320 = smul.u32 2, %s25
        %v322 = vld [vmem:[%s308] sm:$0xff]
        %v323 = vld [vmem:[%s308 + $0x8] sm:$0xff]
        %v324 = vpack.c.bf16 %v323, %v322
        %v325 = vld [vmem:[%s3] sm:$0xf]
        %v326 = vld [vmem:[%s3 + $0x4] sm:$0xf]
        %v327 = vld [vmem:[%s3 + $0x8] sm:$0xf]
        %v328 = vld [vmem:[%s3 + $0xc] sm:$0xf]
        %v333 = vunpack.c.l.b16 %v325
        %v334 = vunpack.c.l.b16 %v326
        %v335 = vunpack.c.l.b16 %v327
        %v336 = vunpack.c.l.b16 %v328
        %v337 = vpack.c.b16 %v334, %v333
        %v338 = vpack.c.b16 %v336, %v335
        %vm341 = vcmask 261120
        %v343 = vsel %vm341, %v324, 0
        %345 = vmatprep.subr.bf16.mxu0 0
        %346 = vmatpush1.bf16.msra.mxu0 %v337
        %347 = vmatprep.subr.bf16.mxu0 0
        %348 = vmatpush1.bf16.msra.mxu0 %v338
        %349 = vmatprep.subr.bf16.mxu0 0
        %350 = vmatpush1.bf16.msra.mxu0 0
        %351 = vmatprep.subr.bf16.mxu0 0
        %352 = vmatpush1.bf16.msra.mxu0 0
        %353 = vmatprep.subr.bf16.mxu0 0
        %354 = vmatpush1.bf16.msra.mxu0 0
        %355 = vmatprep.subr.bf16.mxu0 0
        %356 = vmatpush1.bf16.msra.mxu0 0
        %357 = vmatprep.subr.bf16.mxu0 0
        %358 = vmatpush1.bf16.msra.mxu0 0
        %359 = vmatprep.subr.bf16.mxu0 0
        %360 = vmatpush1.bf16.msra.mxu0 0
        %361 = vmatprep.subr.bf16.mxu0 0
        %362 = vmatpush1.bf16.msra.mxu0 0
        %363 = vmatprep.subr.bf16.mxu0 0
        %364 = vmatpush1.bf16.msra.mxu0 0
        %365 = vmatprep.subr.bf16.mxu0 0
        %366 = vmatpush1.bf16.msra.mxu0 0
        %367 = vmatprep.subr.bf16.mxu0 0
        %368 = vmatpush1.bf16.msra.mxu0 0
        %369 = vmatprep.subr.bf16.mxu0 0
        %370 = vmatpush1.bf16.msra.mxu0 0
        %371 = vmatprep.subr.bf16.mxu0 0
        %372 = vmatpush1.bf16.msra.mxu0 0
        %373 = vmatprep.subr.bf16.mxu0 0
        %374 = vmatpush1.bf16.msra.mxu0 0
        %375 = vmatprep.subr.bf16.mxu0 0
        %376 = vmatpush1.bf16.msra.mxu0 0
        %377 = vmatprep.mubr.bf16.mxu0 0
        %378 = vmatmul.mubr.bf16.gmra.mrb[0].mxu0 %v343
        %v379 = vpop.f32.mrb[0].mxu0
        %v380 = vadd.f32 0.0, %v379
        %v381 = vpop.f32.mrb[0].mxu0
        %v382 = vpop.f32.mrb[0].mxu0
        %v383 = vadd.f32 0.0, %v382
        %v384 = vpop.f32.mrb[0].mxu0
        %385 = vdwg.mxu0
        %v386 = vpack.c.bf16 %v383, %v380
        %v387 = vld [vmem:[%s314] sm:$0xf]
        %v388 = vld [vmem:[%s314 + $0x4] sm:$0xf]
        %v389 = vld [vmem:[%s314 + $0x8] sm:$0xf]
        %v390 = vld [vmem:[%s314 + $0xc] sm:$0xf]
        %v391 = vld [vmem:[%s314 + $0x10] sm:$0xf]
        %v392 = vld [vmem:[%s314 + $0x14] sm:$0xf]
        %v393 = vld [vmem:[%s314 + $0x18] sm:$0xf]
        %v394 = vld [vmem:[%s314 + $0x1c] sm:$0xf]
        %v395 = vld [vmem:[%s314 + $0x20] sm:$0xf]
        %v396 = vld [vmem:[%s314 + $0x24] sm:$0xf]
        %v397 = vld [vmem:[%s314 + $0x28] sm:$0xf]
        %v398 = vld [vmem:[%s314 + $0x2c] sm:$0xf]
        %v399 = vld [vmem:[%s314 + $0x30] sm:$0xf]
        %v400 = vld [vmem:[%s314 + $0x34] sm:$0xf]
        %v401 = vld [vmem:[%s314 + $0x38] sm:$0xf]
        %v402 = vld [vmem:[%s314 + $0x3c] sm:$0xf]
        %v403 = vld [vmem:[%s319] sm:$0xf]
        %v404 = vld [vmem:[%s319 + $0x4] sm:$0xf]
        %v405 = vld [vmem:[%s319 + $0x8] sm:$0xf]
        %v406 = vld [vmem:[%s319 + $0xc] sm:$0xf]
        %v407 = vld [vmem:[%s319 + $0x10] sm:$0xf]
        %v408 = vld [vmem:[%s319 + $0x14] sm:$0xf]
        %v409 = vld [vmem:[%s319 + $0x18] sm:$0xf]
        %v410 = vld [vmem:[%s319 + $0x1c] sm:$0xf]
        %v411 = vld [vmem:[%s319 + $0x20] sm:$0xf]
        %v412 = vld [vmem:[%s319 + $0x24] sm:$0xf]
        %v413 = vld [vmem:[%s319 + $0x28] sm:$0xf]
        %v414 = vld [vmem:[%s319 + $0x2c] sm:$0xf]
        %v415 = vld [vmem:[%s319 + $0x30] sm:$0xf]
        %v416 = vld [vmem:[%s319 + $0x34] sm:$0xf]
        %v417 = vld [vmem:[%s319 + $0x38] sm:$0xf]
        %v418 = vld [vmem:[%s319 + $0x3c] sm:$0xf]
        %v435 = vunpack.c.l.b16 %v387
        %v436 = vunpack.c.l.b16 %v388
        %v437 = vunpack.c.l.b16 %v389
        %v438 = vunpack.c.l.b16 %v390
        %v439 = vunpack.c.l.b16 %v391
        %v440 = vunpack.c.l.b16 %v392
        %v441 = vunpack.c.l.b16 %v393
        %v442 = vunpack.c.l.b16 %v394
        %v443 = vunpack.c.l.b16 %v395
        %v444 = vunpack.c.l.b16 %v396
        %v445 = vunpack.c.l.b16 %v397
        %v446 = vunpack.c.l.b16 %v398
        %v447 = vunpack.c.l.b16 %v399
        %v448 = vunpack.c.l.b16 %v400
        %v449 = vunpack.c.l.b16 %v401
        %v450 = vunpack.c.l.b16 %v402
        %v451 = vpack.c.b16 %v436, %v435
        %v452 = vpack.c.b16 %v438, %v437
        %v453 = vpack.c.b16 %v440, %v439
        %v454 = vpack.c.b16 %v442, %v441
        %v455 = vpack.c.b16 %v444, %v443
        %v456 = vpack.c.b16 %v446, %v445
        %v457 = vpack.c.b16 %v448, %v447
        %v458 = vpack.c.b16 %v450, %v449
        %vm459 = vcmask 130048
        %v461 = vsel %vm459, %v386, 0
        %v464 = vsel %vm459, %v451, 0
        %v467 = vsel %vm459, %v452, 0
        %v470 = vsel %vm459, %v453, 0
        %v473 = vsel %vm459, %v454, 0
        %v476 = vsel %vm459, %v455, 0
        %v479 = vsel %vm459, %v456, 0
        %v482 = vsel %vm459, %v457, 0
        %v485 = vsel %vm459, %v458, 0
        %487 = vmatprep.subr.bf16.mxu0 0
        %488 = vmatpush1.bf16.xpose.msra.mxu0 %v464
        %489 = vmatprep.subr.bf16.mxu0 0
        %490 = vmatpush1.bf16.xpose.msra.mxu0 %v467
        %491 = vmatprep.subr.bf16.mxu0 0
        %492 = vmatpush1.bf16.xpose.msra.mxu0 %v470
        %493 = vmatprep.subr.bf16.mxu0 0
        %494 = vmatpush1.bf16.xpose.msra.mxu0 %v473
        %495 = vmatprep.subr.bf16.mxu0 0
        %496 = vmatpush1.bf16.xpose.msra.mxu0 %v476
        %497 = vmatprep.subr.bf16.mxu0 0
        %498 = vmatpush1.bf16.xpose.msra.mxu0 %v479
        %499 = vmatprep.subr.bf16.mxu0 0
        %500 = vmatpush1.bf16.xpose.msra.mxu0 %v482
        %501 = vmatprep.subr.bf16.mxu0 0
        %502 = vmatpush1.bf16.xpose.msra.mxu0 %v485
        %503 = vmatprep.subr.bf16.mxu0 0
        %504 = vmatpush1.bf16.xpose.msra.mxu0 0
        %505 = vmatprep.subr.bf16.mxu0 0
        %506 = vmatpush1.bf16.xpose.msra.mxu0 0
        %507 = vmatprep.subr.bf16.mxu0 0
        %508 = vmatpush1.bf16.xpose.msra.mxu0 0
        %509 = vmatprep.subr.bf16.mxu0 0
        %510 = vmatpush1.bf16.xpose.msra.mxu0 0
        %511 = vmatprep.subr.bf16.mxu0 0
        %512 = vmatpush1.bf16.xpose.msra.mxu0 0
        %513 = vmatprep.subr.bf16.mxu0 0
        %514 = vmatpush1.bf16.xpose.msra.mxu0 0
        %515 = vmatprep.subr.bf16.mxu0 0
        %516 = vmatpush1.bf16.xpose.msra.mxu0 0
        %517 = vmatprep.subr.bf16.mxu0 0
        %518 = vmatpush1.bf16.xpose.msra.mxu0 0
        %519 = vmatprep.mubr.bf16.mxu0 0
        %520 = vmatmul.mubr.bf16.gmra.mrb[0].mxu0 %v461
        %v521 = vpop.f32.mrb[0].mxu0
        %v522 = vadd.f32 0.0, %v521
        %v523 = vpop.f32.mrb[0].mxu0
        %v524 = vpop.f32.mrb[0].mxu0
        %v525 = vadd.f32 0.0, %v524
        %v526 = vpop.f32.mrb[0].mxu0
        %527 = vdwg.mxu0
        %v528 = vlaneseq
        %v529 = vand.u32 %v528, 127
        %vm530 = vcmp.lt.s32.totalorder %v529, 8
        %v531 = vsel %vm530, %v522, -1e+30
        %v532 = vsel %vm530, %v525, -1e+30
        %533 = vmax.xlane.f32.xlu0 %v531
        %v534 = vpop.xlane.xlu0 %533
        %535 = vmax.xlane.f32.xlu0 %v532
        %v536 = vpop.xlane.xlu0 %535
        %v537 = vsub.f32 %v531, %v534
        %v538 = vsub.f32 %v532, %v536
        %v539 = vmul.f32 %v537, 1.442695
        %v540 = vpow.pop %v539
        %v541 = vmul.f32 %v538, 1.442695
        %v542 = vpow.pop %v541
        %543 = vadd.xlane.f32.xlu0 %v540
        %v544 = vpop.xlane.xlu0 %543
        %545 = vadd.xlane.f32.xlu0 %v542
        %v546 = vpop.xlane.xlu0 %545
        %v547 = vrcp.pop %v544
        %v548 = vrcp.pop %v546
        %v549 = vmul.f32 %v540, %v547
        %v550 = vmul.f32 %v542, %v548
        %v551 = vpack.c.bf16 %v550, %v549
        %v568 = vunpack.c.l.b16 %v403
        %v569 = vunpack.c.l.b16 %v404
        %v570 = vunpack.c.l.b16 %v405
        %v571 = vunpack.c.l.b16 %v406
        %v572 = vunpack.c.l.b16 %v407
        %v573 = vunpack.c.l.b16 %v408
        %v574 = vunpack.c.l.b16 %v409
        %v575 = vunpack.c.l.b16 %v410
        %v576 = vunpack.c.l.b16 %v411
        %v577 = vunpack.c.l.b16 %v412
        %v578 = vunpack.c.l.b16 %v413
        %v579 = vunpack.c.l.b16 %v414
        %v580 = vunpack.c.l.b16 %v415
        %v581 = vunpack.c.l.b16 %v416
        %v582 = vunpack.c.l.b16 %v417
        %v583 = vunpack.c.l.b16 %v418
        %v584 = vpack.c.b16 %v569, %v568
        %v585 = vpack.c.b16 %v571, %v570
        %v586 = vpack.c.b16 %v573, %v572
        %v587 = vpack.c.b16 %v575, %v574
        %v588 = vpack.c.b16 %v577, %v576
        %v589 = vpack.c.b16 %v579, %v578
        %v590 = vpack.c.b16 %v581, %v580
        %v591 = vpack.c.b16 %v583, %v582
        %600 = vmatprep.subr.bf16.mxu0 0
        %601 = vmatpush1.bf16.msra.mxu0 %v584
        %602 = vmatprep.subr.bf16.mxu0 0
        %603 = vmatpush1.bf16.msra.mxu0 %v585
        %604 = vmatprep.subr.bf16.mxu0 0
        %605 = vmatpush1.bf16.msra.mxu0 %v586
        %606 = vmatprep.subr.bf16.mxu0 0
        %607 = vmatpush1.bf16.msra.mxu0 %v587
        %608 = vmatprep.subr.bf16.mxu0 0
        %609 = vmatpush1.bf16.msra.mxu0 %v588
        %610 = vmatprep.subr.bf16.mxu0 0
        %611 = vmatpush1.bf16.msra.mxu0 %v589
        %612 = vmatprep.subr.bf16.mxu0 0
        %613 = vmatpush1.bf16.msra.mxu0 %v590
        %614 = vmatprep.subr.bf16.mxu0 0
        %615 = vmatpush1.bf16.msra.mxu0 %v591
        %616 = vmatprep.subr.bf16.mxu0 0
        %617 = vmatpush1.bf16.msra.mxu0 0
        %618 = vmatprep.subr.bf16.mxu0 0
        %619 = vmatpush1.bf16.msra.mxu0 0
        %620 = vmatprep.subr.bf16.mxu0 0
        %621 = vmatpush1.bf16.msra.mxu0 0
        %622 = vmatprep.subr.bf16.mxu0 0
        %623 = vmatpush1.bf16.msra.mxu0 0
        %624 = vmatprep.subr.bf16.mxu0 0
        %625 = vmatpush1.bf16.msra.mxu0 0
        %626 = vmatprep.subr.bf16.mxu0 0
        %627 = vmatpush1.bf16.msra.mxu0 0
        %628 = vmatprep.subr.bf16.mxu0 0
        %629 = vmatpush1.bf16.msra.mxu0 0
        %630 = vmatprep.subr.bf16.mxu0 0
        %631 = vmatpush1.bf16.msra.mxu0 0
        %632 = vmatprep.mubr.bf16.mxu0 0
        %633 = vmatmul.mubr.bf16.gmra.mrb[0].mxu0 %v551
        %v634 = vpop.f32.mrb[0].mxu0
        %v635 = vadd.f32 0.0, %v634
        %v636 = vpop.f32.mrb[0].mxu0
        %v637 = vpop.f32.mrb[0].mxu0
        %v638 = vadd.f32 0.0, %v637
        %v639 = vpop.f32.mrb[0].mxu0
        %640 = vdwg.mxu0
        %s641 = scalar_lea.vmem %s314, 64
        %v642 = vld [vmem:[%s641] sm:$0xf]
        %v643 = vld [vmem:[%s641 + $0x4] sm:$0xf]
        %v644 = vld [vmem:[%s641 + $0x8] sm:$0xf]
        %v645 = vld [vmem:[%s641 + $0xc] sm:$0xf]
        %v646 = vld [vmem:[%s641 + $0x10] sm:$0xf]
        %v647 = vld [vmem:[%s641 + $0x14] sm:$0xf]
        %v648 = vld [vmem:[%s641 + $0x18] sm:$0xf]
        %v649 = vld [vmem:[%s641 + $0x1c] sm:$0xf]
        %v650 = vld [vmem:[%s641 + $0x20] sm:$0xf]
        %v651 = vld [vmem:[%s641 + $0x24] sm:$0xf]
        %v652 = vld [vmem:[%s641 + $0x28] sm:$0xf]
        %v653 = vld [vmem:[%s641 + $0x2c] sm:$0xf]
        %v654 = vld [vmem:[%s641 + $0x30] sm:$0xf]
        %v655 = vld [vmem:[%s641 + $0x34] sm:$0xf]
        %v656 = vld [vmem:[%s641 + $0x38] sm:$0xf]
        %v657 = vld [vmem:[%s641 + $0x3c] sm:$0xf]
        %s658 = scalar_lea.vmem %s319, 64
        %v659 = vld [vmem:[%s658] sm:$0xf]
        %v660 = vld [vmem:[%s658 + $0x4] sm:$0xf]
        %v661 = vld [vmem:[%s658 + $0x8] sm:$0xf]
        %v662 = vld [vmem:[%s658 + $0xc] sm:$0xf]
        %v663 = vld [vmem:[%s658 + $0x10] sm:$0xf]
        %v664 = vld [vmem:[%s658 + $0x14] sm:$0xf]
        %v665 = vld [vmem:[%s658 + $0x18] sm:$0xf]
        %v666 = vld [vmem:[%s658 + $0x1c] sm:$0xf]
        %v667 = vld [vmem:[%s658 + $0x20] sm:$0xf]
        %v668 = vld [vmem:[%s658 + $0x24] sm:$0xf]
        %v669 = vld [vmem:[%s658 + $0x28] sm:$0xf]
        %v670 = vld [vmem:[%s658 + $0x2c] sm:$0xf]
        %v671 = vld [vmem:[%s658 + $0x30] sm:$0xf]
        %v672 = vld [vmem:[%s658 + $0x34] sm:$0xf]
        %v673 = vld [vmem:[%s658 + $0x38] sm:$0xf]
        %v674 = vld [vmem:[%s658 + $0x3c] sm:$0xf]
        %676 = vrot.lane.b32.xlu0 %v386, 112
        %v677 = vpop.permute.xlu0 %676
        %v694 = vunpack.c.l.b16 %v642
        %v695 = vunpack.c.l.b16 %v643
        %v696 = vunpack.c.l.b16 %v644
        %v697 = vunpack.c.l.b16 %v645
        %v698 = vunpack.c.l.b16 %v646
        %v699 = vunpack.c.l.b16 %v647
        %v700 = vunpack.c.l.b16 %v648
        %v701 = vunpack.c.l.b16 %v649
        %v702 = vunpack.c.l.b16 %v650
        %v703 = vunpack.c.l.b16 %v651
        %v704 = vunpack.c.l.b16 %v652
        %v705 = vunpack.c.l.b16 %v653
        %v706 = vunpack.c.l.b16 %v654
        %v707 = vunpack.c.l.b16 %v655
        %v708 = vunpack.c.l.b16 %v656
        %v709 = vunpack.c.l.b16 %v657
        %v710 = vpack.c.b16 %v695, %v694
        %v711 = vpack.c.b16 %v697, %v696
        %v712 = vpack.c.b16 %v699, %v698
        %v713 = vpack.c.b16 %v701, %v700
        %v714 = vpack.c.b16 %v703, %v702
        %v715 = vpack.c.b16 %v705, %v704
        %v716 = vpack.c.b16 %v707, %v706
        %v717 = vpack.c.b16 %v709, %v708
        %v719 = vsel %vm459, %v677, 0
        %v722 = vsel %vm459, %v710, 0
        %v725 = vsel %vm459, %v711, 0
        %v728 = vsel %vm459, %v712, 0
        %v731 = vsel %vm459, %v713, 0
        %v734 = vsel %vm459, %v714, 0
        %v737 = vsel %vm459, %v715, 0
        %v740 = vsel %vm459, %v716, 0
        %v743 = vsel %vm459, %v717, 0
        %745 = vmatprep.subr.bf16.mxu0 0
        %746 = vmatpush1.bf16.xpose.msra.mxu0 %v722
        %747 = vmatprep.subr.bf16.mxu0 0
        %748 = vmatpush1.bf16.xpose.msra.mxu0 %v725
        %749 = vmatprep.subr.bf16.mxu0 0
        %750 = vmatpush1.bf16.xpose.msra.mxu0 %v728
        %751 = vmatprep.subr.bf16.mxu0 0
        %752 = vmatpush1.bf16.xpose.msra.mxu0 %v731
        %753 = vmatprep.subr.bf16.mxu0 0
        %754 = vmatpush1.bf16.xpose.msra.mxu0 %v734
        %755 = vmatprep.subr.bf16.mxu0 0
        %756 = vmatpush1.bf16.xpose.msra.mxu0 %v737
        %757 = vmatprep.subr.bf16.mxu0 0
        %758 = vmatpush1.bf16.xpose.msra.mxu0 %v740
        %759 = vmatprep.subr.bf16.mxu0 0
        %760 = vmatpush1.bf16.xpose.msra.mxu0 %v743
        %761 = vmatprep.subr.bf16.mxu0 0
        %762 = vmatpush1.bf16.xpose.msra.mxu0 0
        %763 = vmatprep.subr.bf16.mxu0 0
        %764 = vmatpush1.bf16.xpose.msra.mxu0 0
        %765 = vmatprep.subr.bf16.mxu0 0
        %766 = vmatpush1.bf16.xpose.msra.mxu0 0
        %767 = vmatprep.subr.bf16.mxu0 0
        %768 = vmatpush1.bf16.xpose.msra.mxu0 0
        %769 = vmatprep.subr.bf16.mxu0 0
        %770 = vmatpush1.bf16.xpose.msra.mxu0 0
        %771 = vmatprep.subr.bf16.mxu0 0
        %772 = vmatpush1.bf16.xpose.msra.mxu0 0
        %773 = vmatprep.subr.bf16.mxu0 0
        %774 = vmatpush1.bf16.xpose.msra.mxu0 0
        %775 = vmatprep.subr.bf16.mxu0 0
        %776 = vmatpush1.bf16.xpose.msra.mxu0 0
        %777 = vmatprep.mubr.bf16.mxu0 0
        %778 = vmatmul.mubr.bf16.gmra.mrb[0].mxu0 %v719
        %v779 = vpop.f32.mrb[0].mxu0
        %v780 = vadd.f32 0.0, %v779
        %v781 = vpop.f32.mrb[0].mxu0
        %v782 = vpop.f32.mrb[0].mxu0
        %v783 = vadd.f32 0.0, %v782
        %v784 = vpop.f32.mrb[0].mxu0
        %785 = vdwg.mxu0
        %v786 = vsel %vm530, %v780, -1e+30
        %v787 = vsel %vm530, %v783, -1e+30
        %788 = vmax.xlane.f32.xlu0 %v786
        %v789 = vpop.xlane.xlu0 %788
        %790 = vmax.xlane.f32.xlu0 %v787
        %v791 = vpop.xlane.xlu0 %790
        %v792 = vsub.f32 %v786, %v789
        %v793 = vsub.f32 %v787, %v791
        %v794 = vmul.f32 %v792, 1.442695
        %v795 = vpow.pop %v794
        %v796 = vmul.f32 %v793, 1.442695
        %v797 = vpow.pop %v796
        %798 = vadd.xlane.f32.xlu0 %v795
        %v799 = vpop.xlane.xlu0 %798
        %800 = vadd.xlane.f32.xlu0 %v797
        %v801 = vpop.xlane.xlu0 %800
        %v802 = vrcp.pop %v799
        %v803 = vrcp.pop %v801
        %v804 = vmul.f32 %v795, %v802
        %v805 = vmul.f32 %v797, %v803
        %v806 = vpack.c.bf16 %v805, %v804
        %v823 = vunpack.c.l.b16 %v659
        %v824 = vunpack.c.l.b16 %v660
        %v825 = vunpack.c.l.b16 %v661
        %v826 = vunpack.c.l.b16 %v662
        %v827 = vunpack.c.l.b16 %v663
        %v828 = vunpack.c.l.b16 %v664
        %v829 = vunpack.c.l.b16 %v665
        %v830 = vunpack.c.l.b16 %v666
        %v831 = vunpack.c.l.b16 %v667
        %v832 = vunpack.c.l.b16 %v668
        %v833 = vunpack.c.l.b16 %v669
        %v834 = vunpack.c.l.b16 %v670
        %v835 = vunpack.c.l.b16 %v671
        %v836 = vunpack.c.l.b16 %v672
        %v837 = vunpack.c.l.b16 %v673
        %v838 = vunpack.c.l.b16 %v674
        %v839 = vpack.c.b16 %v824, %v823
        %v840 = vpack.c.b16 %v826, %v825
        %v841 = vpack.c.b16 %v828, %v827
        %v842 = vpack.c.b16 %v830, %v829
        %v843 = vpack.c.b16 %v832, %v831
        %v844 = vpack.c.b16 %v834, %v833
        %v845 = vpack.c.b16 %v836, %v835
        %v846 = vpack.c.b16 %v838, %v837
        %855 = vmatprep.subr.bf16.mxu0 0
        %856 = vmatpush1.bf16.msra.mxu0 %v839
        %857 = vmatprep.subr.bf16.mxu0 0
        %858 = vmatpush1.bf16.msra.mxu0 %v840
        %859 = vmatprep.subr.bf16.mxu0 0
        %860 = vmatpush1.bf16.msra.mxu0 %v841
        %861 = vmatprep.subr.bf16.mxu0 0
        %862 = vmatpush1.bf16.msra.mxu0 %v842
        %863 = vmatprep.subr.bf16.mxu0 0
        %864 = vmatpush1.bf16.msra.mxu0 %v843
        %865 = vmatprep.subr.bf16.mxu0 0
        %866 = vmatpush1.bf16.msra.mxu0 %v844
        %867 = vmatprep.subr.bf16.mxu0 0
        %868 = vmatpush1.bf16.msra.mxu0 %v845
        %869 = vmatprep.subr.bf16.mxu0 0
        %870 = vmatpush1.bf16.msra.mxu0 %v846
        %871 = vmatprep.subr.bf16.mxu0 0
        %872 = vmatpush1.bf16.msra.mxu0 0
        %873 = vmatprep.subr.bf16.mxu0 0
        %874 = vmatpush1.bf16.msra.mxu0 0
        %875 = vmatprep.subr.bf16.mxu0 0
        %876 = vmatpush1.bf16.msra.mxu0 0
        %877 = vmatprep.subr.bf16.mxu0 0
        %878 = vmatpush1.bf16.msra.mxu0 0
        %879 = vmatprep.subr.bf16.mxu0 0
        %880 = vmatpush1.bf16.msra.mxu0 0
        %881 = vmatprep.subr.bf16.mxu0 0
        %882 = vmatpush1.bf16.msra.mxu0 0
        %883 = vmatprep.subr.bf16.mxu0 0
        %884 = vmatpush1.bf16.msra.mxu0 0
        %885 = vmatprep.subr.bf16.mxu0 0
        %886 = vmatpush1.bf16.msra.mxu0 0
        %887 = vmatprep.mubr.bf16.mxu0 0
        %888 = vmatmul.mubr.bf16.gmra.mrb[0].mxu0 %v806
        %v889 = vpop.f32.mrb[0].mxu0
        %v890 = vadd.f32 0.0, %v889
        %v891 = vpop.f32.mrb[0].mxu0
        %v892 = vpop.f32.mrb[0].mxu0
        %v893 = vadd.f32 0.0, %v892
        %v894 = vpop.f32.mrb[0].mxu0
        %895 = vdwg.mxu0
        %898 = vrot.lane.b32.xlu0 %v890, 16
        %v899 = vpop.permute.xlu0 %898
        %900 = vrot.lane.b32.xlu0 %v893, 16
        %v901 = vpop.permute.xlu0 %900
        %v904 = vsel %vm459, %v635, %v899
        %v905 = vsel %vm459, %v638, %v901
        %v906 = vpack.c.bf16 %v905, %v904
        %v907 = vld [vmem:[%s4] sm:$0xf]
        %v908 = vld [vmem:[%s4 + $0x4] sm:$0xf]
        %v909 = vld [vmem:[%s4 + $0x8] sm:$0xf]
        %v910 = vld [vmem:[%s4 + $0xc] sm:$0xf]
        %v911 = vld [vmem:[%s5] sm:$0x1]
        %v913 = vlaneseq
        %v914 = vshrl.u32 %v913, 7
        %v915 = vsub.s32 0, %v914
        %v916 = vrot.slane %v911, %v915
        %v922 = vunpack.c.l.b16 %v907
        %v923 = vunpack.c.l.b16 %v908
        %v924 = vunpack.c.l.b16 %v909
        %v925 = vunpack.c.l.b16 %v910
        %v926 = vpack.c.b16 %v923, %v922
        %v927 = vpack.c.b16 %v925, %v924
        %v931 = vsel %vm341, %v906, 0
        %933 = vmatprep.subr.bf16.mxu0 0
        %934 = vmatpush1.bf16.msra.mxu0 %v926
        %935 = vmatprep.subr.bf16.mxu0 0
        %936 = vmatpush1.bf16.msra.mxu0 %v927
        %937 = vmatprep.subr.bf16.mxu0 0
        %938 = vmatpush1.bf16.msra.mxu0 0
        %939 = vmatprep.subr.bf16.mxu0 0
        %940 = vmatpush1.bf16.msra.mxu0 0
        %941 = vmatprep.subr.bf16.mxu0 0
        %942 = vmatpush1.bf16.msra.mxu0 0
        %943 = vmatprep.subr.bf16.mxu0 0
        %944 = vmatpush1.bf16.msra.mxu0 0
        %945 = vmatprep.subr.bf16.mxu0 0
        %946 = vmatpush1.bf16.msra.mxu0 0
        %947 = vmatprep.subr.bf16.mxu0 0
        %948 = vmatpush1.bf16.msra.mxu0 0
        %949 = vmatprep.subr.bf16.mxu0 0
        %950 = vmatpush1.bf16.msra.mxu0 0
        %951 = vmatprep.subr.bf16.mxu0 0
        %952 = vmatpush1.bf16.msra.mxu0 0
        %953 = vmatprep.subr.bf16.mxu0 0
        %954 = vmatpush1.bf16.msra.mxu0 0
        %955 = vmatprep.subr.bf16.mxu0 0
        %956 = vmatpush1.bf16.msra.mxu0 0
        %957 = vmatprep.subr.bf16.mxu0 0
        %958 = vmatpush1.bf16.msra.mxu0 0
        %959 = vmatprep.subr.bf16.mxu0 0
        %960 = vmatpush1.bf16.msra.mxu0 0
        %961 = vmatprep.subr.bf16.mxu0 0
        %962 = vmatpush1.bf16.msra.mxu0 0
        %963 = vmatprep.subr.bf16.mxu0 0
        %964 = vmatpush1.bf16.msra.mxu0 0
        %965 = vmatprep.mubr.bf16.mxu0 0
        %966 = vmatmul.mubr.bf16.gmra.mrb[0].mxu0 %v931
        %v967 = vpop.f32.mrb[0].mxu0
        %v968 = vadd.f32 %v916, %v967
        %v969 = vpop.f32.mrb[0].mxu0
        %v970 = vpop.f32.mrb[0].mxu0
        %v971 = vadd.f32 %v916, %v970
        %v972 = vpop.f32.mrb[0].mxu0
        %973 = vdwg.mxu0
        %974 = vst [vmem:[%s299] sm:$0xff] %v968
        %975 = vst [vmem:[%s299 + $0x8] sm:$0xff] %v971
        %s976 = sand.u32 %s185, 1
        %s977 = scalar_lea.sflag [#allocation3], %s976
        %s978 = sand.u32 %s185, 1
        %s979 = smul.addr %s978, 16
        %s980 = scalar_lea.vmem [#allocation2], %s979
        // Predicated region
        $region45: #{tpu_custom_call.1} parent=43 // pred_check
          %p981 = pneg %p195
        $region46: #{tpu_custom_call.1} parent=43 // pred_check_branch
          %983 = sbr.rel (%p981) target = $region48
        $region47: #{tpu_custom_call.1} parent=43 // pred_region
          %s984 = smul.u32 2, %s25
          %s986 = ssub.s32 256, 256
          %987 = vsyncadd %s977, %s986
          %s988 = smul.addr %s24, 2
          %s989 = sadd.s32 %s984, %s988
          %s990 = smul.addr %s989, 128
          %s991 = scalar_lea.hbm %s6, %s990
          %s992 = sshll.u32 %s980, 4
          %s993 = int_to_ptr.vmem [resolvable:$true] %s992
          %998 = dma.vmem_to_hbm [thread:$0]  %s993, 256, %s991, %s977, 128, 128, 8
        $region48: #{tpu_custom_call.1} parent=43 // pred_fallthru
          _
      $region44: #{tpu_custom_call.1} parent=5 // pred_fallthru
        _
      %p999 = scmp.le.s32.totalorder 2, %s15
      // Predicated region
      $region49: #{tpu_custom_call.1} parent=5 // pred_check
        %p1000 = pneg %p999
      $region50: #{tpu_custom_call.1} parent=5 // pred_check_branch
        %1002 = sbr.rel (%p1000) target = $region52
      $region51: #{tpu_custom_call.1} parent=5 // pred_region
        %s1003 = ssub.s32 %s15, 2
        // Predicated region
        $region53: #{tpu_custom_call.1} parent=51 // pred_check
          %p1004 = pneg %p201
        $region54: #{tpu_custom_call.1} parent=51 // pred_check_branch
          %1006 = sbr.rel (%p1004) target = $region56
        $region55: #{tpu_custom_call.1} parent=51 // pred_region
          %s1007 = sand.u32 %s186, 1
          %s1008 = scalar_lea.sflag [#allocation3], %s1007
          %s1009 = sand.u32 %s186, 1
          %s1010 = smul.addr %s1009, 16
          %s1011 = scalar_lea.vmem [#allocation2], %s1010
          %1012 = dma.done %s1008, 256
        $region56: #{tpu_custom_call.1} parent=51 // pred_fallthru
          _
      $region52: #{tpu_custom_call.1} parent=5 // pred_fallthru
        _
    $region6: #{tpu_custom_call.1} parent=1 // loop_footer
      %s19 = sadd.s32 1, %s15
    $region7: #{tpu_custom_call.1} parent=1 // loop_footer_branch
      %14 = sbr.rel target = $region3
    $region8: #{tpu_custom_call.1} parent=1 // loop_exit
      _
    %1013 = vsyncpa [#allocation3], 1
    %s1014 = scalar_lea.sflag [#allocation3], 1
    %1015 = vsyncpa %s1014, 1

</llo_original>
